<compile_context>
chip_gen: v6e
topology: v6e:2x2x1
jax: 0.10.0
libtpu: 0.0.40
codegen_flags: <defaults>
</compile_context>

<pallas_src>
import functools

import jax
import jax.numpy as jnp
from jax.experimental import pallas as pl
from jax.experimental.pallas import tpu as pltpu

LN_EPS = 1e-5


def _round_up(x, m):
    return (x + m - 1) // m * m


def _layernorm_finalize(y, gamma, beta, out_dim, pad_c, out_dtype):
    """LayerNorm over the last dim of y (f32), with out_p >= out_dim lanes.

    Padded lanes of y are exactly 0 (zero-padded W columns and bias), so sums
    over all lanes equal sums over the real lanes; the variance only needs a
    pad_c * mean^2 correction. Padded output lanes land at 0 because gamma and
    beta are zero-padded.
    """
    inv_n = jnp.float32(1.0 / out_dim)
    mean = jnp.sum(y, axis=-1, keepdims=True) * inv_n
    centered = y - mean
    ssq = jnp.sum(centered * centered, axis=-1, keepdims=True)
    if pad_c:
        ssq = ssq - jnp.float32(pad_c) * mean * mean
    inv_std = jax.lax.rsqrt(ssq * inv_n + LN_EPS)
    return (centered * inv_std * gamma + beta).astype(out_dtype)


def _kernel_resident_w(out_dim, pad_c, x_ref, w_ref, p_ref, o_ref):
    """1-D row grid; whole (K_p, out_p) bf16 weight stays VMEM-resident."""
    # Cast the x tile to bf16 in VMEM (cheap VPU op hidden under the MXU)
    # instead of materializing a bf16 copy of x in HBM.
    y = jnp.dot(x_ref[...].astype(jnp.bfloat16), w_ref[...],
                preferred_element_type=jnp.float32)
    p = p_ref[...]                              # (3, out_p): bias/gamma/beta
    y = y + p[0:1, :]
    o_ref[...] = _layernorm_finalize(y, p[1:2, :], p[2:3, :],
                                     out_dim, pad_c, o_ref.dtype)


def _kernel_tiled_k(out_dim, pad_c, x_ref, w_ref, p_ref, o_ref, acc_ref):
    """2-D grid (rows, K); f32 accumulator in VMEM, LN on the last K step."""
    k = pl.program_id(1)

    @pl.when(k == 0)
    def _init():
        acc_ref[...] = jnp.zeros_like(acc_ref)

    acc_ref[...] += jnp.dot(x_ref[...].astype(jnp.bfloat16), w_ref[...],
                            preferred_element_type=jnp.float32)

    @pl.when(k == pl.num_programs(1) - 1)
    def _finalize():
        p = p_ref[...]
        y = acc_ref[...] + p[0:1, :]
        o_ref[...] = _layernorm_finalize(y, p[1:2, :], p[2:3, :],
                                         out_dim, pad_c, o_ref.dtype)


def _vmem_budget_bytes():
    """~75% of physical VMEM: ~48 MiB on v7x, ~96 MiB on v5e/v6e."""
    cap = 64 * 1024 * 1024
    try:
        cap = int(getattr(pltpu.get_tpu_info(), "vmem_capacity_bytes", cap))
    except Exception:
        pass
    return (cap * 3) // 4


def _pick_tiles(N, in_dim, out_p, x_bytes, out_bytes, budget):
    """Return (tm, tk, resident_w) fitting within `budget` bytes of VMEM."""
    K_full = _round_up(in_dim, 256)
    row_cap = _round_up(N, 128)
    # With a resident W, splitting rows into >=2 tiles is essentially free
    # (W is fetched once regardless) and lets v7x's 2nd TensorCore share the
    # "parallel" row axis.
    row_cap_res = max(128, _round_up(-(-N // 2), 128)) if N > 256 else row_cap

    def vmem_use(tm, tk):
        return (2 * tm * tk * x_bytes            # x tiles (double-buffered)
                + 2 * tk * out_p * 2             # W tiles (bf16)
                + tm * out_p * 4                 # f32 accumulator / LN slab
                + 2 * tm * out_p * out_bytes     # output tiles
                + 2 * 3 * out_p * 4)             # packed bias/gamma/beta

    # 1) Prefer the resident-W path: W streams from HBM exactly once.
    for tm in (768, 512, 384, 256, 128):
        tm = min(tm, row_cap_res)
        if vmem_use(tm, K_full) <= budget:
            return tm, K_full, True
    # 2) K-tiled fallback (large weights): maximize tm first -- arithmetic
    #    intensity w.r.t. the re-streamed W equals tm rows of reuse.
    for tm in (768, 512, 384, 256, 128):
        tm = min(tm, row_cap)
        for tk in (1024, 512, 256):
            tk = min(tk, K_full)
            if vmem_use(tm, tk) <= budget:
                return tm, tk, False
    return 128, 256, False                       # last resort


def linear_norm(x, w, b, gamma, beta, *, out_dtype=None):
    """Fused y = LayerNorm(x @ W + b) over the last dim.

    x: (N, in_dim); w: (in_dim, out_dim); b, gamma, beta: (out_dim,).
    MXU operands are bf16 (cast in-kernel); accumulation and LayerNorm math
    are float32. out_dtype defaults to x.dtype; pass jnp.bfloat16 to halve
    output writeback when downstream tolerates it.
    """
    N, in_dim = x.shape
    assert w.shape[0] == in_dim
    out_dim = w.shape[1]
    out_dtype = out_dtype or x.dtype

    out_p = _round_up(out_dim, 256)              # 256-aligned lanes: full MXU passes
    pad_c = out_p - out_dim

    budget = _vmem_budget_bytes()
    x_bytes = jnp.dtype(x.dtype).itemsize
    out_bytes = jnp.dtype(out_dtype).itemsize
    tm, tk, resident = _pick_tiles(N, in_dim, out_p, x_bytes, out_bytes, budget)

    N_p = _round_up(N, tm)
    K_p = _round_up(in_dim, tk)                  # pad K to tk; zero rows/cols are inert

    # Pad x (kept in its original dtype; cast to bf16 inside the kernel).
    x_p = x
    if (N_p, K_p) != (N, in_dim):
        x_p = jnp.pad(x, ((0, N_p - N), (0, K_p - in_dim)))
    # Pad W once, feed the MXU bf16.
    w_p = w
    if (K_p, out_p) != (in_dim, out_dim):
        w_p = jnp.pad(w, ((0, K_p - in_dim), (0, out_p - out_dim)))
    w_bf = w_p.astype(jnp.bfloat16)

    # Packed bias / gamma / beta (one DMA, one buffer); padded lanes are zero.
    params = jnp.stack([
        jnp.pad(b.astype(jnp.float32), (0, pad_c)),
        jnp.pad(gamma.astype(jnp.float32), (0, pad_c)),
        jnp.pad(beta.astype(jnp.float32), (0, pad_c)),
    ])

    if resident:
        grid = (N_p // tm,)
        kernel = functools.partial(_kernel_resident_w, out_dim, pad_c)
        in_specs = [
            pl.BlockSpec((tm, K_p), lambda i: (i, 0)),        # x row tile
            pl.BlockSpec((K_p, out_p), lambda i: (0, 0)),     # constant block: W DMA'd once
            pl.BlockSpec((3, out_p), lambda i: (0, 0)),       # bias/gamma/beta
        ]
        out_specs = pl.BlockSpec((tm, out_p), lambda i: (i, 0))
        scratch_shapes = ()
        dim_sem = ("parallel",)
    else:
        grid = (N_p // tm, K_p // tk)
        kernel = functools.partial(_kernel_tiled_k, out_dim, pad_c)
        in_specs = [
            pl.BlockSpec((tm, tk), lambda i, k: (i, k)),       # x tile
            pl.BlockSpec((tk, out_p), lambda i, k: (k, 0)),    # W tile
            pl.BlockSpec((3, out_p), lambda i, k: (0, 0)),     # bias/gamma/beta
        ]
        out_specs = pl.BlockSpec((tm, out_p), lambda i, k: (i, 0))
        scratch_shapes = (pltpu.VMEM((tm, out_p), jnp.float32),)
        dim_sem = ("parallel", "arbitrary")

    out_padded = pl.pallas_call(
        kernel,
        out_shape=jax.ShapeDtypeStruct((N_p, out_p), out_dtype),
        grid_spec=pltpu.PrefetchScalarGridSpec(
            num_scalar_prefetch=0,
            grid=grid,
            in_specs=in_specs,
            out_specs=out_specs,
            scratch_shapes=scratch_shapes,
        ),
        compiler_params=pltpu.CompilerParams(
            dimension_semantics=dim_sem,
            vmem_limit_bytes=int(budget),
        ),
    )(x_p, w_bf, params)

    return out_padded[:N, :out_dim]


def linear_norm_ref(x, w, b, gamma, beta):
    """Pure-JAX reference: f32 Linear + LayerNorm (module semantics)."""
    y = jnp.dot(
        x.astype(jnp.float32), w.astype(jnp.float32),
        precision=jax.lax.Precision.HIGHEST,
    ) + b
    mean = jnp.mean(y, axis=-1, keepdims=True)
    var = jnp.mean((y - mean) ** 2, axis=-1, keepdims=True)
    return ((y - mean) * jax.lax.rsqrt(var + LN_EPS)) * gamma + beta


if __name__ == "__main__":
    # Small shapes consistent with the module: batch=2, seq=8, in_dim=32, out_dim=64.
    batch, seq, in_dim, out_dim = 2, 8, 32, 64

    key = jax.random.PRNGKey(0)
    kx, kw, kb = jax.random.split(key, 3)

    x = jax.random.normal(kx, (batch, seq, in_dim), dtype=jnp.float32)

    # Deterministic parameter init (PyTorch-like scales, not a checkpoint load).
    bound = 1.0 / (in_dim ** 0.5)
    w = jax.random.uniform(kw, (in_dim, out_dim), minval=-bound, maxval=bound,
                           dtype=jnp.float32)            # Linear weight (pre-transposed)
    b = jax.random.uniform(kb, (out_dim,), minval=-bound, maxval=bound,
                           dtype=jnp.float32)            # Linear bias
    gamma = jnp.ones((out_dim,), dtype=jnp.float32)      # LayerNorm weight
    beta = jnp.zeros((out_dim,), dtype=jnp.float32)      # LayerNorm bias

    # Flatten leading dims onto rows for the kernel, then restore shape.
    x2d = x.reshape(batch * seq, in_dim)
    out2d = linear_norm(x2d, w, b, gamma, beta)
    out = out2d.reshape(batch, seq, out_dim)
    jax.block_until_ready(out)

    # Check 1: against exact-f32 module semantics (loose tol: bf16 MXU operands).
    ref_f32 = linear_norm_ref(x2d, w, b, gamma, beta).reshape(batch, seq, out_dim)
    assert jnp.allclose(out, ref_f32, atol=3e-2, rtol=3e-2), "mismatch vs f32 reference"

    # Check 2: against a reference with matched numerics (bf16-rounded matmul
    # operands, f32 accumulate + f32 LayerNorm) -- tight tolerance.
    xb = x2d.astype(jnp.bfloat16).astype(jnp.float32)
    wb = w.astype(jnp.bfloat16).astype(jnp.float32)
    ref_bf = linear_norm_ref(xb, wb, b, gamma, beta).reshape(batch, seq, out_dim)
    assert jnp.allclose(out, ref_bf, atol=5e-4, rtol=5e-4), "mismatch vs bf16-matched reference"

    print("KERNEL_OK")
</pallas_src>

<mosaic_0001>
module attributes {stable_mosaic.version = 11 : i64} {
  func.func @_kernel_resident_w(%arg0: i32, %arg1: memref<128x256xf32, #tpu.memory_space<vmem>>, %arg2: memref<256x256xbf16, #tpu.memory_space<vmem>>, %arg3: memref<3x256xf32, #tpu.memory_space<vmem>>, %arg4: memref<128x256xf32, #tpu.memory_space<vmem>>) attributes {dimension_semantics = [#tpu.dimension_semantics<parallel>], iteration_bounds = array<i64: 1>, scalar_prefetch = 0 : i64, scratch_operands = 0 : i64, tpu.core_type = #tpu.core_type<tc>, window_params = [{transform_indices = @transform_0, window_bounds = array<i64: 128, 256>}, {pipeline_mode = #tpu.pipeline_mode<synchronous>, transform_indices = @transform_1, window_bounds = array<i64: 256, 256>}, {pipeline_mode = #tpu.pipeline_mode<synchronous>, transform_indices = @transform_2, window_bounds = array<i64: 3, 256>}, {transform_indices = @transform_3, window_bounds = array<i64: 128, 256>}]} {
    %c0 = arith.constant 0 : index
    %c0_0 = arith.constant 0 : index
    %0 = vector.load %arg1[%c0, %c0_0] : memref<128x256xf32, #tpu.memory_space<vmem>>, vector<128x256xf32>
    %1 = arith.truncf %0 : vector<128x256xf32> to vector<128x256xbf16>
    %c0_1 = arith.constant 0 : index
    %c0_2 = arith.constant 0 : index
    %2 = vector.load %arg2[%c0_1, %c0_2] : memref<256x256xbf16, #tpu.memory_space<vmem>>, vector<256x256xbf16>
    %cst = arith.constant dense<0.000000e+00> : vector<128x256xf32>
    %3 = tpu.matmul %1, %2, %cst {dimension_numbers = #tpu.dot_dimension_numbers<[1], [0], [0], [1], [0, 0, 1, 1], [], []>} : vector<128x256xbf16>, vector<256x256xbf16>, vector<128x256xf32> -> vector<128x256xf32>
    %c0_3 = arith.constant 0 : index
    %c0_4 = arith.constant 0 : index
    %4 = vector.load %arg3[%c0_3, %c0_4] : memref<3x256xf32, #tpu.memory_space<vmem>>, vector<3x256xf32>
    %5 = vector.extract_strided_slice %4 {offsets = [0, 0], sizes = [1, 256], strides = [1, 1]} : vector<3x256xf32> to vector<1x256xf32>
    %6 = vector.broadcast %5 : vector<1x256xf32> to vector<128x256xf32>
    %7 = arith.addf %3, %6 : vector<128x256xf32>
    %8 = vector.extract_strided_slice %4 {offsets = [1, 0], sizes = [1, 256], strides = [1, 1]} : vector<3x256xf32> to vector<1x256xf32>
    %9 = vector.extract_strided_slice %4 {offsets = [2, 0], sizes = [1, 256], strides = [1, 1]} : vector<3x256xf32> to vector<1x256xf32>
    %cst_5 = arith.constant dense<0.000000e+00> : vector<128xf32>
    %10 = vector.multi_reduction <add>, %7, %cst_5 [1] : vector<128x256xf32> to vector<128xf32>
    %11 = vector.shape_cast %10 : vector<128xf32> to vector<128x1xf32>
    %cst_6 = arith.constant 1.562500e-02 : f32
    %12 = vector.broadcast %cst_6 : f32 to vector<128x1xf32>
    %13 = arith.mulf %11, %12 : vector<128x1xf32>
    %14 = vector.broadcast %13 : vector<128x1xf32> to vector<128x256xf32>
    %15 = arith.subf %7, %14 : vector<128x256xf32>
    %16 = arith.mulf %15, %15 : vector<128x256xf32>
    %cst_7 = arith.constant dense<0.000000e+00> : vector<128xf32>
    %17 = vector.multi_reduction <add>, %16, %cst_7 [1] : vector<128x256xf32> to vector<128xf32>
    %18 = vector.shape_cast %17 : vector<128xf32> to vector<128x1xf32>
    %cst_8 = arith.constant 1.920000e+02 : f32
    %19 = vector.broadcast %cst_8 : f32 to vector<128x1xf32>
    %20 = arith.mulf %19, %13 : vector<128x1xf32>
    %21 = arith.mulf %20, %13 : vector<128x1xf32>
    %22 = arith.subf %18, %21 : vector<128x1xf32>
    %cst_9 = arith.constant 1.562500e-02 : f32
    %23 = vector.broadcast %cst_9 : f32 to vector<128x1xf32>
    %24 = arith.mulf %22, %23 : vector<128x1xf32>
    %cst_10 = arith.constant 9.99999974E-6 : f32
    %25 = vector.broadcast %cst_10 : f32 to vector<128x1xf32>
    %26 = arith.addf %24, %25 : vector<128x1xf32>
    %27 = math.rsqrt %26 : vector<128x1xf32>
    %28 = vector.broadcast %27 : vector<128x1xf32> to vector<128x256xf32>
    %29 = arith.mulf %15, %28 : vector<128x256xf32>
    %30 = vector.broadcast %8 : vector<1x256xf32> to vector<128x256xf32>
    %31 = arith.mulf %29, %30 : vector<128x256xf32>
    %32 = vector.broadcast %9 : vector<1x256xf32> to vector<128x256xf32>
    %33 = arith.addf %31, %32 : vector<128x256xf32>
    %c0_11 = arith.constant 0 : index
    %c0_12 = arith.constant 0 : index
    %34 = vector.load %arg4[%c0_11, %c0_12] : memref<128x256xf32, #tpu.memory_space<vmem>>, vector<128x256xf32>
    tpu.vector_store %arg4[%c0_11, %c0_12], %33 {strides = array<i32>} : memref<128x256xf32, #tpu.memory_space<vmem>>, vector<128x256xf32>,
    return
  }
  func.func @transform_0(%arg0: i32) -> (i32, i32) {
    %c0_i32 = arith.constant 0 : i32
    %c0_i32_0 = arith.constant 0 : i32
    return %arg0, %c0_i32 : i32, i32
  }
  func.func @transform_1(%arg0: i32) -> (i32, i32) {
    %c0_i32 = arith.constant 0 : i32
    %c0_i32_0 = arith.constant 0 : i32
    %c0_i32_1 = arith.constant 0 : i32
    return %c0_i32, %c0_i32_0 : i32, i32
  }
  func.func @transform_2(%arg0: i32) -> (i32, i32) {
    %c0_i32 = arith.constant 0 : i32
    %c0_i32_0 = arith.constant 0 : i32
    %c0_i32_1 = arith.constant 0 : i32
    return %c0_i32, %c0_i32_0 : i32, i32
  }
  func.func @transform_3(%arg0: i32) -> (i32, i32) {
    %c0_i32 = arith.constant 0 : i32
    %c0_i32_0 = arith.constant 0 : i32
    return %arg0, %c0_i32 : i32, i32
  }
}

</mosaic_0001>

<llo_original>
// kernel: tpu_custom_call.1
$region0: #{tpu_custom_call.1}
  #allocation0 [shape = 'u32[]', space=smem, size = 0x4, offset = 0x4, fixed_abs, tag = 'smem constant byte address 0x4 - core index']
  #allocation1 [shape = 'u32[144,128]{1,0:T(1,128)}', space=vmem, size = 0x12000, scoped, tag = 'internal scratch']
  %s0 = inlined_call_operand.hbm [shape: f32[128,256], index: 0, kind: input, shape index: {}]
  %s1 = inlined_call_operand.hbm [shape: bf16[256,256], index: 1, kind: input, shape index: {}]
  %s2 = inlined_call_operand.hbm [shape: f32[3,256], index: 2, kind: input, shape index: {}]
  %s3 = inlined_call_operand.hbm [shape: f32[128,256], index: 3, kind: output, shape index: {}]
  %s4 = sld [smem:[#allocation0]]
  $region34: #{tpu_custom_call.1} parent=0
    _
  %s6 = ssub.s32 1, %s4
  %s7 = scalar_select 0, %s6, %s4
  $region1: #{tpu_custom_call.1} parent=0
    #allocation2 [shape = 'u8[131072]{0}', space=vmem, size = 0x20000, scoped, tag = 'input window, operand 0, single buffered']
    #allocation3 [shape = 's32[1]{0}', space=sflag, size = 0x4, scoped, tag = 'scoped memory for tpu_custom_call.1']
    #allocation4 [shape = 's32[1]{0}', space=sflag, size = 0x4, scoped, tag = 'scoped memory for tpu_custom_call.1']
    #allocation5 [shape = 'u8[131072]{0}', space=vmem, size = 0x20000, scoped, tag = 'input window, operand 1, single buffered']
    #allocation6 [shape = 's32[1]{0}', space=sflag, size = 0x4, scoped, tag = 'scoped memory for tpu_custom_call.1']
    #allocation7 [shape = 'u8[4096]{0}', space=vmem, size = 0x1000, scoped, tag = 'input window, operand 2, single buffered']
    #allocation8 [shape = 'u8[131072]{0}', space=vmem, size = 0x20000, scoped, tag = 'output window, operand 0, single buffered']
    %8 = vsyncpa [#allocation3], 0
    %9 = vsyncpa [#allocation6], 0
    %10 = vsyncpa [#allocation4], 0
    // Predicated region
    $region2: #{tpu_custom_call.1} parent=1 // pred_check
      _
    $region3: #{tpu_custom_call.1} parent=1 // pred_check_branch
      %12 = sbr.rel (0) target = $region5
    $region4: #{tpu_custom_call.1} parent=1 // pred_region
      %s14 = ssub.s32 4096, 4096
      %15 = vsyncadd [#allocation3], %s14
      %s16 = sshll.u32 [#allocation2], 4
      %s17 = int_to_ptr.vmem [resolvable:$true] %s16
      %22 = dma.hbm_to_vmem [thread:$0]  %s0, 4096, %s17, [#allocation3], 256, 256, 16
    $region5: #{tpu_custom_call.1} parent=1 // pred_fallthru
      _
    // Predicated region
    $region6: #{tpu_custom_call.1} parent=1 // pred_check
      _
    $region7: #{tpu_custom_call.1} parent=1 // pred_check_branch
      %24 = sbr.rel (0) target = $region9
    $region8: #{tpu_custom_call.1} parent=1 // pred_region
      %s26 = ssub.s32 4096, 4096
      %27 = vsyncadd [#allocation6], %s26
      %s28 = sshll.u32 [#allocation5], 4
      %s29 = int_to_ptr.vmem [resolvable:$true] %s28
      %34 = dma.hbm_to_vmem [thread:$0]  %s1, 4096, %s29, [#allocation6], 128, 128, 8
    $region9: #{tpu_custom_call.1} parent=1 // pred_fallthru
      _
    // Predicated region
    $region10: #{tpu_custom_call.1} parent=1 // pred_check
      _
    $region11: #{tpu_custom_call.1} parent=1 // pred_check_branch
      %36 = sbr.rel (0) target = $region13
    $region12: #{tpu_custom_call.1} parent=1 // pred_region
      %s38 = ssub.s32 128, 128
      %39 = vsyncadd [#allocation6], %s38
      %s41 = sshll.u32 [#allocation7], 4
      %s42 = int_to_ptr.vmem [resolvable:$true] %s41
      %44 = dma.hbm_to_vmem [thread:$0]  %s2, 128, %s42, [#allocation6]
    $region13: #{tpu_custom_call.1} parent=1 // pred_fallthru
      _
    // Predicated region
    $region14: #{tpu_custom_call.1} parent=1 // pred_check
      _
    $region15: #{tpu_custom_call.1} parent=1 // pred_check_branch
      %46 = sbr.rel (0) target = $region17
    $region16: #{tpu_custom_call.1} parent=1 // pred_region
      %47 = dma.done [#allocation3], 4096
    $region17: #{tpu_custom_call.1} parent=1 // pred_fallthru
      _
    // Predicated region
    $region18: #{tpu_custom_call.1} parent=1 // pred_check
      _
    $region19: #{tpu_custom_call.1} parent=1 // pred_check_branch
      %49 = sbr.rel (0) target = $region21
    $region20: #{tpu_custom_call.1} parent=1 // pred_region
      %50 = dma.done [#allocation6], 4096
    $region21: #{tpu_custom_call.1} parent=1 // pred_fallthru
      _
    // Predicated region
    $region22: #{tpu_custom_call.1} parent=1 // pred_check
      _
    $region23: #{tpu_custom_call.1} parent=1 // pred_check_branch
      %52 = sbr.rel (0) target = $region25
    $region24: #{tpu_custom_call.1} parent=1 // pred_region
      %53 = dma.done [#allocation6], 128
    $region25: #{tpu_custom_call.1} parent=1 // pred_fallthru
      _
    %v54 = vld [vmem:[#allocation2] sm:$0xff]
    %v55 = vld [vmem:[#allocation2 + $0x8] sm:$0xff]
    %v56 = vld [vmem:[#allocation2 + $0x10] sm:$0xff]
    %v57 = vld [vmem:[#allocation2 + $0x18] sm:$0xff]
    %v58 = vld [vmem:[#allocation2 + $0x20] sm:$0xff]
    %v59 = vld [vmem:[#allocation2 + $0x28] sm:$0xff]
    %v60 = vld [vmem:[#allocation2 + $0x30] sm:$0xff]
    %v61 = vld [vmem:[#allocation2 + $0x38] sm:$0xff]
    %v62 = vld [vmem:[#allocation2 + $0x40] sm:$0xff]
    %v63 = vld [vmem:[#allocation2 + $0x48] sm:$0xff]
    %v64 = vld [vmem:[#allocation2 + $0x50] sm:$0xff]
    %v65 = vld [vmem:[#allocation2 + $0x58] sm:$0xff]
    %v66 = vld [vmem:[#allocation2 + $0x60] sm:$0xff]
    %v67 = vld [vmem:[#allocation2 + $0x68] sm:$0xff]
    %v68 = vld [vmem:[#allocation2 + $0x70] sm:$0xff]
    %v69 = vld [vmem:[#allocation2 + $0x78] sm:$0xff]
    %v70 = vld [vmem:[#allocation2 + $0x80] sm:$0xff]
    %v71 = vld [vmem:[#allocation2 + $0x88] sm:$0xff]
    %v72 = vld [vmem:[#allocation2 + $0x90] sm:$0xff]
    %v73 = vld [vmem:[#allocation2 + $0x98] sm:$0xff]
    %v74 = vld [vmem:[#allocation2 + $0xa0] sm:$0xff]
    %v75 = vld [vmem:[#allocation2 + $0xa8] sm:$0xff]
    %v76 = vld [vmem:[#allocation2 + $0xb0] sm:$0xff]
    %v77 = vld [vmem:[#allocation2 + $0xb8] sm:$0xff]
    %v78 = vld [vmem:[#allocation2 + $0xc0] sm:$0xff]
    %v79 = vld [vmem:[#allocation2 + $0xc8] sm:$0xff]
    %v80 = vld [vmem:[#allocation2 + $0xd0] sm:$0xff]
    %v81 = vld [vmem:[#allocation2 + $0xd8] sm:$0xff]
    %v82 = vld [vmem:[#allocation2 + $0xe0] sm:$0xff]
    %v83 = vld [vmem:[#allocation2 + $0xe8] sm:$0xff]
    %v84 = vld [vmem:[#allocation2 + $0xf0] sm:$0xff]
    %v85 = vld [vmem:[#allocation2 + $0xf8] sm:$0xff]
    %v86 = vpack.c.bf16 %v56, %v54
    %v87 = vpack.c.bf16 %v57, %v55
    %v88 = vpack.c.bf16 %v60, %v58
    %v89 = vpack.c.bf16 %v61, %v59
    %v90 = vpack.c.bf16 %v64, %v62
    %v91 = vpack.c.bf16 %v65, %v63
    %v92 = vpack.c.bf16 %v68, %v66
    %v93 = vpack.c.bf16 %v69, %v67
    %v94 = vpack.c.bf16 %v72, %v70
    %v95 = vpack.c.bf16 %v73, %v71
    %v96 = vpack.c.bf16 %v76, %v74
    %v97 = vpack.c.bf16 %v77, %v75
    %v98 = vpack.c.bf16 %v80, %v78
    %v99 = vpack.c.bf16 %v81, %v79
    %v100 = vpack.c.bf16 %v84, %v82
    %v101 = vpack.c.bf16 %v85, %v83
    %v102 = vld [vmem:[#allocation5] sm:$0xff]
    %v103 = vld [vmem:[#allocation5 + $0x8] sm:$0xff]
    %v104 = vld [vmem:[#allocation5 + $0x10] sm:$0xff]
    %v105 = vld [vmem:[#allocation5 + $0x18] sm:$0xff]
    %v106 = vld [vmem:[#allocation5 + $0x20] sm:$0xff]
    %v107 = vld [vmem:[#allocation5 + $0x28] sm:$0xff]
    %v108 = vld [vmem:[#allocation5 + $0x30] sm:$0xff]
    %v109 = vld [vmem:[#allocation5 + $0x38] sm:$0xff]
    %v110 = vld [vmem:[#allocation5 + $0x40] sm:$0xff]
    %v111 = vld [vmem:[#allocation5 + $0x48] sm:$0xff]
    %v112 = vld [vmem:[#allocation5 + $0x50] sm:$0xff]
    %v113 = vld [vmem:[#allocation5 + $0x58] sm:$0xff]
    %v114 = vld [vmem:[#allocation5 + $0x60] sm:$0xff]
    %v115 = vld [vmem:[#allocation5 + $0x68] sm:$0xff]
    %v116 = vld [vmem:[#allocation5 + $0x70] sm:$0xff]
    %v117 = vld [vmem:[#allocation5 + $0x78] sm:$0xff]
    %v118 = vld [vmem:[#allocation5 + $0x80] sm:$0xff]
    %v119 = vld [vmem:[#allocation5 + $0x88] sm:$0xff]
    %v120 = vld [vmem:[#allocation5 + $0x90] sm:$0xff]
    %v121 = vld [vmem:[#allocation5 + $0x98] sm:$0xff]
    %v122 = vld [vmem:[#allocation5 + $0xa0] sm:$0xff]
    %v123 = vld [vmem:[#allocation5 + $0xa8] sm:$0xff]
    %v124 = vld [vmem:[#allocation5 + $0xb0] sm:$0xff]
    %v125 = vld [vmem:[#allocation5 + $0xb8] sm:$0xff]
    %v126 = vld [vmem:[#allocation5 + $0xc0] sm:$0xff]
    %v127 = vld [vmem:[#allocation5 + $0xc8] sm:$0xff]
    %v128 = vld [vmem:[#allocation5 + $0xd0] sm:$0xff]
    %v129 = vld [vmem:[#allocation5 + $0xd8] sm:$0xff]
    %v130 = vld [vmem:[#allocation5 + $0xe0] sm:$0xff]
    %v131 = vld [vmem:[#allocation5 + $0xe8] sm:$0xff]
    %v132 = vld [vmem:[#allocation5 + $0xf0] sm:$0xff]
    %v133 = vld [vmem:[#allocation5 + $0xf8] sm:$0xff]
    %v134 = vld [vmem:[#allocation7] sm:$0x77]
    %v136 = vlaneseq
    %v137 = vshrl.u32 %v136, 7
    %v138 = vsub.s32 0, %v137
    %v139 = vrot.slane %v134, %v138
    %v140 = vlaneseq
    %v141 = vshrl.u32 %v140, 7
    %v142 = vsub.s32 4, %v141
    %v143 = vrot.slane %v134, %v142
    %v146 = vlaneseq
    %v147 = vshrl.u32 %v146, 7
    %v148 = vsub.s32 0, %v147
    %v149 = vrot.slane %v139, %v148
    %v150 = vlaneseq
    %v151 = vshrl.u32 %v150, 7
    %v152 = vsub.s32 0, %v151
    %v153 = vrot.slane %v143, %v152
    %v186 = vunpack.c.l.b16 %v102
    %v187 = vunpack.c.h.b16 %v102
    %v188 = vunpack.c.l.b16 %v103
    %v189 = vunpack.c.h.b16 %v103
    %v190 = vunpack.c.l.b16 %v104
    %v191 = vunpack.c.h.b16 %v104
    %v192 = vunpack.c.l.b16 %v105
    %v193 = vunpack.c.h.b16 %v105
    %v194 = vunpack.c.l.b16 %v106
    %v195 = vunpack.c.h.b16 %v106
    %v196 = vunpack.c.l.b16 %v107
    %v197 = vunpack.c.h.b16 %v107
    %v198 = vunpack.c.l.b16 %v108
    %v199 = vunpack.c.h.b16 %v108
    %v200 = vunpack.c.l.b16 %v109
    %v201 = vunpack.c.h.b16 %v109
    %v202 = vunpack.c.l.b16 %v110
    %v203 = vunpack.c.h.b16 %v110
    %v204 = vunpack.c.l.b16 %v111
    %v205 = vunpack.c.h.b16 %v111
    %v206 = vunpack.c.l.b16 %v112
    %v207 = vunpack.c.h.b16 %v112
    %v208 = vunpack.c.l.b16 %v113
    %v209 = vunpack.c.h.b16 %v113
    %v210 = vunpack.c.l.b16 %v114
    %v211 = vunpack.c.h.b16 %v114
    %v212 = vunpack.c.l.b16 %v115
    %v213 = vunpack.c.h.b16 %v115
    %v214 = vunpack.c.l.b16 %v116
    %v215 = vunpack.c.h.b16 %v116
    %v216 = vunpack.c.l.b16 %v117
    %v217 = vunpack.c.h.b16 %v117
    %v218 = vunpack.c.l.b16 %v118
    %v219 = vunpack.c.h.b16 %v118
    %v220 = vunpack.c.l.b16 %v119
    %v221 = vunpack.c.h.b16 %v119
    %v222 = vunpack.c.l.b16 %v120
    %v223 = vunpack.c.h.b16 %v120
    %v224 = vunpack.c.l.b16 %v121
    %v225 = vunpack.c.h.b16 %v121
    %v226 = vunpack.c.l.b16 %v122
    %v227 = vunpack.c.h.b16 %v122
    %v228 = vunpack.c.l.b16 %v123
    %v229 = vunpack.c.h.b16 %v123
    %v230 = vunpack.c.l.b16 %v124
    %v231 = vunpack.c.h.b16 %v124
    %v232 = vunpack.c.l.b16 %v125
    %v233 = vunpack.c.h.b16 %v125
    %v234 = vunpack.c.l.b16 %v126
    %v235 = vunpack.c.h.b16 %v126
    %v236 = vunpack.c.l.b16 %v127
    %v237 = vunpack.c.h.b16 %v127
    %v238 = vunpack.c.l.b16 %v128
    %v239 = vunpack.c.h.b16 %v128
    %v240 = vunpack.c.l.b16 %v129
    %v241 = vunpack.c.h.b16 %v129
    %v242 = vunpack.c.l.b16 %v130
    %v243 = vunpack.c.h.b16 %v130
    %v244 = vunpack.c.l.b16 %v131
    %v245 = vunpack.c.h.b16 %v131
    %v246 = vunpack.c.l.b16 %v132
    %v247 = vunpack.c.h.b16 %v132
    %v248 = vunpack.c.l.b16 %v133
    %v249 = vunpack.c.h.b16 %v133
    %v250 = vpack.c.b16 %v188, %v186
    %v251 = vpack.c.b16 %v189, %v187
    %v252 = vpack.c.b16 %v192, %v190
    %v253 = vpack.c.b16 %v193, %v191
    %v254 = vpack.c.b16 %v196, %v194
    %v255 = vpack.c.b16 %v197, %v195
    %v256 = vpack.c.b16 %v200, %v198
    %v257 = vpack.c.b16 %v201, %v199
    %v258 = vpack.c.b16 %v204, %v202
    %v259 = vpack.c.b16 %v205, %v203
    %v260 = vpack.c.b16 %v208, %v206
    %v261 = vpack.c.b16 %v209, %v207
    %v262 = vpack.c.b16 %v212, %v210
    %v263 = vpack.c.b16 %v213, %v211
    %v264 = vpack.c.b16 %v216, %v214
    %v265 = vpack.c.b16 %v217, %v215
    %v266 = vpack.c.b16 %v220, %v218
    %v267 = vpack.c.b16 %v221, %v219
    %v268 = vpack.c.b16 %v224, %v222
    %v269 = vpack.c.b16 %v225, %v223
    %v270 = vpack.c.b16 %v228, %v226
    %v271 = vpack.c.b16 %v229, %v227
    %v272 = vpack.c.b16 %v232, %v230
    %v273 = vpack.c.b16 %v233, %v231
    %v274 = vpack.c.b16 %v236, %v234
    %v275 = vpack.c.b16 %v237, %v235
    %v276 = vpack.c.b16 %v240, %v238
    %v277 = vpack.c.b16 %v241, %v239
    %v278 = vpack.c.b16 %v244, %v242
    %v279 = vpack.c.b16 %v245, %v243
    %v280 = vpack.c.b16 %v248, %v246
    %v281 = vpack.c.b16 %v249, %v247
    %314 = vmatprep.subr.bf16.mxu0 %v265
    %315 = vmatpush1.bf16.msra.mxu0 %v264
    %316 = vmatprep.subr.bf16.mxu0 %v263
    %317 = vmatpush1.bf16.msra.mxu0 %v262
    %318 = vmatprep.subr.bf16.mxu0 %v261
    %319 = vmatpush1.bf16.msra.mxu0 %v260
    %320 = vmatprep.subr.bf16.mxu0 %v259
    %321 = vmatpush1.bf16.msra.mxu0 %v258
    %322 = vmatprep.subr.bf16.mxu0 %v257
    %323 = vmatpush1.bf16.msra.mxu0 %v256
    %324 = vmatprep.subr.bf16.mxu0 %v255
    %325 = vmatpush1.bf16.msra.mxu0 %v254
    %326 = vmatprep.subr.bf16.mxu0 %v253
    %327 = vmatpush1.bf16.msra.mxu0 %v252
    %328 = vmatprep.subr.bf16.mxu0 %v251
    %329 = vmatpush1.bf16.msra.mxu0 %v250
    %330 = vmatprep.subr.bf16.mxu0 %v281
    %331 = vmatpush2.bf16.msra.mxu0 %v280
    %332 = vmatprep.subr.bf16.mxu0 %v279
    %333 = vmatpush2.bf16.msra.mxu0 %v278
    %334 = vmatprep.subr.bf16.mxu0 %v277
    %335 = vmatpush2.bf16.msra.mxu0 %v276
    %336 = vmatprep.subr.bf16.mxu0 %v275
    %337 = vmatpush2.bf16.msra.mxu0 %v274
    %338 = vmatprep.subr.bf16.mxu0 %v273
    %339 = vmatpush2.bf16.msra.mxu0 %v272
    %340 = vmatprep.subr.bf16.mxu0 %v271
    %341 = vmatpush2.bf16.msra.mxu0 %v270
    %342 = vmatprep.subr.bf16.mxu0 %v269
    %343 = vmatpush2.bf16.msra.mxu0 %v268
    %344 = vmatprep.subr.bf16.mxu0 %v267
    %345 = vmatpush2.bf16.msra.mxu0 %v266
    %346 = vmatprep.mubr.bf16.mxu0 %v87
    %347 = vmatmul.mubr.bf16.gmra.mxu0 %v86
    %v348 = vpop.f32.mrf.mxu0
    %v349 = vadd.f32 %v149, %v348
    %v350 = vpop.f32.mrf.mxu0
    %v351 = vadd.f32 %v153, %v350
    %v352 = vpop.f32.mrf.mxu0
    %v353 = vadd.f32 %v149, %v352
    %v354 = vpop.f32.mrf.mxu0
    %v355 = vadd.f32 %v153, %v354
    %356 = vmatprep.mubr.bf16.mxu0 %v89
    %357 = vmatmul.mubr.bf16.gmra.mxu0 %v88
    %v358 = vpop.f32.mrf.mxu0
    %v359 = vadd.f32 %v149, %v358
    %v360 = vpop.f32.mrf.mxu0
    %v361 = vadd.f32 %v153, %v360
    %v362 = vpop.f32.mrf.mxu0
    %v363 = vadd.f32 %v149, %v362
    %v364 = vpop.f32.mrf.mxu0
    %v365 = vadd.f32 %v153, %v364
    %366 = vmatprep.mubr.bf16.mxu0 %v91
    %367 = vmatmul.mubr.bf16.gmra.mxu0 %v90
    %v368 = vpop.f32.mrf.mxu0
    %v369 = vadd.f32 %v149, %v368
    %v370 = vpop.f32.mrf.mxu0
    %v371 = vadd.f32 %v153, %v370
    %v372 = vpop.f32.mrf.mxu0
    %v373 = vadd.f32 %v149, %v372
    %v374 = vpop.f32.mrf.mxu0
    %v375 = vadd.f32 %v153, %v374
    %376 = vmatprep.mubr.bf16.mxu0 %v93
    %377 = vmatmul.mubr.bf16.gmra.mxu0 %v92
    %v378 = vpop.f32.mrf.mxu0
    %v379 = vadd.f32 %v149, %v378
    %v380 = vpop.f32.mrf.mxu0
    %v381 = vadd.f32 %v153, %v380
    %v382 = vpop.f32.mrf.mxu0
    %v383 = vadd.f32 %v149, %v382
    %v384 = vpop.f32.mrf.mxu0
    %v385 = vadd.f32 %v153, %v384
    %386 = vmatprep.mubr.bf16.mxu0 %v95
    %387 = vmatmul.mubr.bf16.gmra.mxu0 %v94
    %v388 = vpop.f32.mrf.mxu0
    %v389 = vadd.f32 %v149, %v388
    %v390 = vpop.f32.mrf.mxu0
    %v391 = vadd.f32 %v153, %v390
    %v392 = vpop.f32.mrf.mxu0
    %v393 = vadd.f32 %v149, %v392
    %v394 = vpop.f32.mrf.mxu0
    %v395 = vadd.f32 %v153, %v394
    %396 = vmatprep.mubr.bf16.mxu0 %v97
    %397 = vmatmul.mubr.bf16.gmra.mxu0 %v96
    %v398 = vpop.f32.mrf.mxu0
    %v399 = vadd.f32 %v149, %v398
    %v400 = vpop.f32.mrf.mxu0
    %v401 = vadd.f32 %v153, %v400
    %v402 = vpop.f32.mrf.mxu0
    %v403 = vadd.f32 %v149, %v402
    %v404 = vpop.f32.mrf.mxu0
    %v405 = vadd.f32 %v153, %v404
    %406 = vmatprep.mubr.bf16.mxu0 %v99
    %407 = vmatmul.mubr.bf16.gmra.mxu0 %v98
    %v408 = vpop.f32.mrf.mxu0
    %v409 = vadd.f32 %v149, %v408
    %v410 = vpop.f32.mrf.mxu0
    %v411 = vadd.f32 %v153, %v410
    %v412 = vpop.f32.mrf.mxu0
    %v413 = vadd.f32 %v149, %v412
    %v414 = vpop.f32.mrf.mxu0
    %v415 = vadd.f32 %v153, %v414
    %416 = vmatprep.mubr.bf16.mxu0 %v101
    %417 = vmatmul.mubr.bf16.gmra.mxu0 %v100
    %v418 = vpop.f32.mrf.mxu0
    %v419 = vadd.f32 %v149, %v418
    %v420 = vpop.f32.mrf.mxu0
    %v421 = vadd.f32 %v153, %v420
    %v422 = vpop.f32.mrf.mxu0
    %v423 = vadd.f32 %v149, %v422
    %v424 = vpop.f32.mrf.mxu0
    %v425 = vadd.f32 %v153, %v424
    %426 = vdwg.mxu0
    %v427 = vadd.f32 %v349, %v351
    %428 = vadd.xlane.f32.xlu0 %v427
    %v429 = vpop.xlane.xlu0 %428
    %v430 = vadd.f32 %v353, %v355
    %431 = vadd.xlane.f32.xlu0 %v430
    %v432 = vpop.xlane.xlu0 %431
    %v433 = vadd.f32 %v359, %v361
    %434 = vadd.xlane.f32.xlu0 %v433
    %v435 = vpop.xlane.xlu0 %434
    %v436 = vadd.f32 %v363, %v365
    %437 = vadd.xlane.f32.xlu0 %v436
    %v438 = vpop.xlane.xlu0 %437
    %v439 = vadd.f32 %v369, %v371
    %440 = vadd.xlane.f32.xlu0 %v439
    %v441 = vpop.xlane.xlu0 %440
    %v442 = vadd.f32 %v373, %v375
    %443 = vadd.xlane.f32.xlu0 %v442
    %v444 = vpop.xlane.xlu0 %443
    %v445 = vadd.f32 %v379, %v381
    %446 = vadd.xlane.f32.xlu0 %v445
    %v447 = vpop.xlane.xlu0 %446
    %v448 = vadd.f32 %v383, %v385
    %449 = vadd.xlane.f32.xlu0 %v448
    %v450 = vpop.xlane.xlu0 %449
    %v451 = vadd.f32 %v389, %v391
    %452 = vadd.xlane.f32.xlu0 %v451
    %v453 = vpop.xlane.xlu0 %452
    %v454 = vadd.f32 %v393, %v395
    %455 = vadd.xlane.f32.xlu0 %v454
    %v456 = vpop.xlane.xlu0 %455
    %v457 = vadd.f32 %v399, %v401
    %458 = vadd.xlane.f32.xlu0 %v457
    %v459 = vpop.xlane.xlu0 %458
    %v460 = vadd.f32 %v403, %v405
    %461 = vadd.xlane.f32.xlu0 %v460
    %v462 = vpop.xlane.xlu0 %461
    %v463 = vadd.f32 %v409, %v411
    %464 = vadd.xlane.f32.xlu0 %v463
    %v465 = vpop.xlane.xlu0 %464
    %v466 = vadd.f32 %v413, %v415
    %467 = vadd.xlane.f32.xlu0 %v466
    %v468 = vpop.xlane.xlu0 %467
    %v469 = vadd.f32 %v419, %v421
    %470 = vadd.xlane.f32.xlu0 %v469
    %v471 = vpop.xlane.xlu0 %470
    %v472 = vadd.f32 %v423, %v425
    %473 = vadd.xlane.f32.xlu0 %v472
    %v474 = vpop.xlane.xlu0 %473
    %v475 = vmul.f32 %v429, 0.015625
    %v476 = vmul.f32 %v432, 0.015625
    %v477 = vmul.f32 %v435, 0.015625
    %v478 = vmul.f32 %v438, 0.015625
    %v479 = vmul.f32 %v441, 0.015625
    %v480 = vmul.f32 %v444, 0.015625
    %v481 = vmul.f32 %v447, 0.015625
    %v482 = vmul.f32 %v450, 0.015625
    %v483 = vmul.f32 %v453, 0.015625
    %v484 = vmul.f32 %v456, 0.015625
    %v485 = vmul.f32 %v459, 0.015625
    %v486 = vmul.f32 %v462, 0.015625
    %v487 = vmul.f32 %v465, 0.015625
    %v488 = vmul.f32 %v468, 0.015625
    %v489 = vmul.f32 %v471, 0.015625
    %v490 = vmul.f32 %v474, 0.015625
    %v491 = vsub.f32 %v349, %v475
    %v492 = vsub.f32 %v351, %v475
    %v493 = vsub.f32 %v353, %v476
    %v494 = vsub.f32 %v355, %v476
    %v495 = vsub.f32 %v359, %v477
    %v496 = vsub.f32 %v361, %v477
    %v497 = vsub.f32 %v363, %v478
    %v498 = vsub.f32 %v365, %v478
    %v499 = vsub.f32 %v369, %v479
    %v500 = vsub.f32 %v371, %v479
    %v501 = vsub.f32 %v373, %v480
    %v502 = vsub.f32 %v375, %v480
    %v503 = vsub.f32 %v379, %v481
    %v504 = vsub.f32 %v381, %v481
    %v505 = vsub.f32 %v383, %v482
    %v506 = vsub.f32 %v385, %v482
    %v507 = vsub.f32 %v389, %v483
    %v508 = vsub.f32 %v391, %v483
    %v509 = vsub.f32 %v393, %v484
    %v510 = vsub.f32 %v395, %v484
    %v511 = vsub.f32 %v399, %v485
    %v512 = vsub.f32 %v401, %v485
    %v513 = vsub.f32 %v403, %v486
    %v514 = vsub.f32 %v405, %v486
    %v515 = vsub.f32 %v409, %v487
    %v516 = vsub.f32 %v411, %v487
    %v517 = vsub.f32 %v413, %v488
    %v518 = vsub.f32 %v415, %v488
    %v519 = vsub.f32 %v419, %v489
    %v520 = vsub.f32 %v421, %v489
    %v521 = vsub.f32 %v423, %v490
    %v522 = vsub.f32 %v425, %v490
    %v523 = vmul.f32 %v491, %v491
    %v524 = vmul.f32 %v492, %v492
    %v525 = vmul.f32 %v493, %v493
    %v526 = vmul.f32 %v494, %v494
    %v527 = vmul.f32 %v495, %v495
    %v528 = vmul.f32 %v496, %v496
    %v529 = vmul.f32 %v497, %v497
    %v530 = vmul.f32 %v498, %v498
    %v531 = vmul.f32 %v499, %v499
    %v532 = vmul.f32 %v500, %v500
    %v533 = vmul.f32 %v501, %v501
    %v534 = vmul.f32 %v502, %v502
    %v535 = vmul.f32 %v503, %v503
    %v536 = vmul.f32 %v504, %v504
    %v537 = vmul.f32 %v505, %v505
    %v538 = vmul.f32 %v506, %v506
    %v539 = vmul.f32 %v507, %v507
    %v540 = vmul.f32 %v508, %v508
    %v541 = vmul.f32 %v509, %v509
    %v542 = vmul.f32 %v510, %v510
    %v543 = vmul.f32 %v511, %v511
    %v544 = vmul.f32 %v512, %v512
    %v545 = vmul.f32 %v513, %v513
    %v546 = vmul.f32 %v514, %v514
    %v547 = vmul.f32 %v515, %v515
    %v548 = vmul.f32 %v516, %v516
    %v549 = vmul.f32 %v517, %v517
    %v550 = vmul.f32 %v518, %v518
    %v551 = vmul.f32 %v519, %v519
    %v552 = vmul.f32 %v520, %v520
    %v553 = vmul.f32 %v521, %v521
    %v554 = vmul.f32 %v522, %v522
    %v555 = vadd.f32 %v523, %v524
    %556 = vadd.xlane.f32.xlu0 %v555
    %v557 = vpop.xlane.xlu0 %556
    %v558 = vadd.f32 %v525, %v526
    %559 = vadd.xlane.f32.xlu0 %v558
    %v560 = vpop.xlane.xlu0 %559
    %v561 = vadd.f32 %v527, %v528
    %562 = vadd.xlane.f32.xlu0 %v561
    %v563 = vpop.xlane.xlu0 %562
    %v564 = vadd.f32 %v529, %v530
    %565 = vadd.xlane.f32.xlu0 %v564
    %v566 = vpop.xlane.xlu0 %565
    %v567 = vadd.f32 %v531, %v532
    %568 = vadd.xlane.f32.xlu0 %v567
    %v569 = vpop.xlane.xlu0 %568
    %v570 = vadd.f32 %v533, %v534
    %571 = vadd.xlane.f32.xlu0 %v570
    %v572 = vpop.xlane.xlu0 %571
    %v573 = vadd.f32 %v535, %v536
    %574 = vadd.xlane.f32.xlu0 %v573
    %v575 = vpop.xlane.xlu0 %574
    %v576 = vadd.f32 %v537, %v538
    %577 = vadd.xlane.f32.xlu0 %v576
    %v578 = vpop.xlane.xlu0 %577
    %v579 = vadd.f32 %v539, %v540
    %580 = vadd.xlane.f32.xlu0 %v579
    %v581 = vpop.xlane.xlu0 %580
    %v582 = vadd.f32 %v541, %v542
    %583 = vadd.xlane.f32.xlu0 %v582
    %v584 = vpop.xlane.xlu0 %583
    %v585 = vadd.f32 %v543, %v544
    %586 = vadd.xlane.f32.xlu0 %v585
    %v587 = vpop.xlane.xlu0 %586
    %v588 = vadd.f32 %v545, %v546
    %589 = vadd.xlane.f32.xlu0 %v588
    %v590 = vpop.xlane.xlu0 %589
    %v591 = vadd.f32 %v547, %v548
    %592 = vadd.xlane.f32.xlu0 %v591
    %v593 = vpop.xlane.xlu0 %592
    %v594 = vadd.f32 %v549, %v550
    %595 = vadd.xlane.f32.xlu0 %v594
    %v596 = vpop.xlane.xlu0 %595
    %v597 = vadd.f32 %v551, %v552
    %598 = vadd.xlane.f32.xlu0 %v597
    %v599 = vpop.xlane.xlu0 %598
    %v600 = vadd.f32 %v553, %v554
    %601 = vadd.xlane.f32.xlu0 %v600
    %v602 = vpop.xlane.xlu0 %601
    %v603 = vmul.f32 %v475, 192.0
    %v604 = vmul.f32 %v476, 192.0
    %v605 = vmul.f32 %v477, 192.0
    %v606 = vmul.f32 %v478, 192.0
    %v607 = vmul.f32 %v479, 192.0
    %v608 = vmul.f32 %v480, 192.0
    %v609 = vmul.f32 %v481, 192.0
    %v610 = vmul.f32 %v482, 192.0
    %v611 = vmul.f32 %v483, 192.0
    %v612 = vmul.f32 %v484, 192.0
    %v613 = vmul.f32 %v485, 192.0
    %v614 = vmul.f32 %v486, 192.0
    %v615 = vmul.f32 %v487, 192.0
    %v616 = vmul.f32 %v488, 192.0
    %v617 = vmul.f32 %v489, 192.0
    %v618 = vmul.f32 %v490, 192.0
    %v619 = vmul.f32 %v603, %v475
    %v620 = vmul.f32 %v604, %v476
    %v621 = vmul.f32 %v605, %v477
    %v622 = vmul.f32 %v606, %v478
    %v623 = vmul.f32 %v607, %v479
    %v624 = vmul.f32 %v608, %v480
    %v625 = vmul.f32 %v609, %v481
    %v626 = vmul.f32 %v610, %v482
    %v627 = vmul.f32 %v611, %v483
    %v628 = vmul.f32 %v612, %v484
    %v629 = vmul.f32 %v613, %v485
    %v630 = vmul.f32 %v614, %v486
    %v631 = vmul.f32 %v615, %v487
    %v632 = vmul.f32 %v616, %v488
    %v633 = vmul.f32 %v617, %v489
    %v634 = vmul.f32 %v618, %v490
    %v635 = vsub.f32 %v557, %v619
    %v636 = vsub.f32 %v560, %v620
    %v637 = vsub.f32 %v563, %v621
    %v638 = vsub.f32 %v566, %v622
    %v639 = vsub.f32 %v569, %v623
    %v640 = vsub.f32 %v572, %v624
    %v641 = vsub.f32 %v575, %v625
    %v642 = vsub.f32 %v578, %v626
    %v643 = vsub.f32 %v581, %v627
    %v644 = vsub.f32 %v584, %v628
    %v645 = vsub.f32 %v587, %v629
    %v646 = vsub.f32 %v590, %v630
    %v647 = vsub.f32 %v593, %v631
    %v648 = vsub.f32 %v596, %v632
    %v649 = vsub.f32 %v599, %v633
    %v650 = vsub.f32 %v602, %v634
    %v651 = vmul.f32 %v635, 0.015625
    %v652 = vmul.f32 %v636, 0.015625
    %v653 = vmul.f32 %v637, 0.015625
    %v654 = vmul.f32 %v638, 0.015625
    %v655 = vmul.f32 %v639, 0.015625
    %v656 = vmul.f32 %v640, 0.015625
    %v657 = vmul.f32 %v641, 0.015625
    %v658 = vmul.f32 %v642, 0.015625
    %v659 = vmul.f32 %v643, 0.015625
    %v660 = vmul.f32 %v644, 0.015625
    %v661 = vmul.f32 %v645, 0.015625
    %v662 = vmul.f32 %v646, 0.015625
    %v663 = vmul.f32 %v647, 0.015625
    %v664 = vmul.f32 %v648, 0.015625
    %v665 = vmul.f32 %v649, 0.015625
    %v666 = vmul.f32 %v650, 0.015625
    %v667 = vadd.f32 %v651, 1e-05
    %v668 = vadd.f32 %v652, 1e-05
    %v669 = vadd.f32 %v653, 1e-05
    %v670 = vadd.f32 %v654, 1e-05
    %v671 = vadd.f32 %v655, 1e-05
    %v672 = vadd.f32 %v656, 1e-05
    %v673 = vadd.f32 %v657, 1e-05
    %v674 = vadd.f32 %v658, 1e-05
    %v675 = vadd.f32 %v659, 1e-05
    %v676 = vadd.f32 %v660, 1e-05
    %v677 = vadd.f32 %v661, 1e-05
    %v678 = vadd.f32 %v662, 1e-05
    %v679 = vadd.f32 %v663, 1e-05
    %v680 = vadd.f32 %v664, 1e-05
    %v681 = vadd.f32 %v665, 1e-05
    %v682 = vadd.f32 %v666, 1e-05
    %v683 = vrsqrt.pop %v667
    %v684 = vrsqrt.pop %v668
    %v685 = vrsqrt.pop %v669
    %v686 = vrsqrt.pop %v670
    %v687 = vrsqrt.pop %v671
    %v688 = vrsqrt.pop %v672
    %v689 = vrsqrt.pop %v673
    %v690 = vrsqrt.pop %v674
    %v691 = vrsqrt.pop %v675
    %v692 = vrsqrt.pop %v676
    %v693 = vrsqrt.pop %v677
    %v694 = vrsqrt.pop %v678
    %v695 = vrsqrt.pop %v679
    %v696 = vrsqrt.pop %v680
    %v697 = vrsqrt.pop %v681
    %v698 = vrsqrt.pop %v682
    %v699 = vmul.f32 %v491, %v683
    %v700 = vmul.f32 %v492, %v683
    %v701 = vmul.f32 %v493, %v684
    %v702 = vmul.f32 %v494, %v684
    %v703 = vmul.f32 %v495, %v685
    %v704 = vmul.f32 %v496, %v685
    %v705 = vmul.f32 %v497, %v686
    %v706 = vmul.f32 %v498, %v686
    %v707 = vmul.f32 %v499, %v687
    %v708 = vmul.f32 %v500, %v687
    %v709 = vmul.f32 %v501, %v688
    %v710 = vmul.f32 %v502, %v688
    %v711 = vmul.f32 %v503, %v689
    %v712 = vmul.f32 %v504, %v689
    %v713 = vmul.f32 %v505, %v690
    %v714 = vmul.f32 %v506, %v690
    %v715 = vmul.f32 %v507, %v691
    %v716 = vmul.f32 %v508, %v691
    %v717 = vmul.f32 %v509, %v692
    %v718 = vmul.f32 %v510, %v692
    %v719 = vmul.f32 %v511, %v693
    %v720 = vmul.f32 %v512, %v693
    %v721 = vmul.f32 %v513, %v694
    %v722 = vmul.f32 %v514, %v694
    %v723 = vmul.f32 %v515, %v695
    %v724 = vmul.f32 %v516, %v695
    %v725 = vmul.f32 %v517, %v696
    %v726 = vmul.f32 %v518, %v696
    %v727 = vmul.f32 %v519, %v697
    %v728 = vmul.f32 %v520, %v697
    %v729 = vmul.f32 %v521, %v698
    %v730 = vmul.f32 %v522, %v698
    %v731 = vlaneseq
    %v732 = vshrl.u32 %v731, 7
    %v733 = vsub.s32 1, %v732
    %v734 = vrot.slane %v134, %v733
    %v735 = vlaneseq
    %v736 = vshrl.u32 %v735, 7
    %v737 = vsub.s32 5, %v736
    %v738 = vrot.slane %v134, %v737
    %v741 = vlaneseq
    %v742 = vshrl.u32 %v741, 7
    %v743 = vsub.s32 1, %v742
    %v744 = vrot.slane %v734, %v743
    %v745 = vlaneseq
    %v746 = vshrl.u32 %v745, 7
    %v747 = vsub.s32 1, %v746
    %v748 = vrot.slane %v738, %v747
    %v749 = vmul.f32 %v699, %v744
    %v750 = vmul.f32 %v700, %v748
    %v751 = vmul.f32 %v701, %v744
    %v752 = vmul.f32 %v702, %v748
    %v753 = vmul.f32 %v703, %v744
    %v754 = vmul.f32 %v704, %v748
    %v755 = vmul.f32 %v705, %v744
    %v756 = vmul.f32 %v706, %v748
    %v757 = vmul.f32 %v707, %v744
    %v758 = vmul.f32 %v708, %v748
    %v759 = vmul.f32 %v709, %v744
    %v760 = vmul.f32 %v710, %v748
    %v761 = vmul.f32 %v711, %v744
    %v762 = vmul.f32 %v712, %v748
    %v763 = vmul.f32 %v713, %v744
    %v764 = vmul.f32 %v714, %v748
    %v765 = vmul.f32 %v715, %v744
    %v766 = vmul.f32 %v716, %v748
    %v767 = vmul.f32 %v717, %v744
    %v768 = vmul.f32 %v718, %v748
    %v769 = vmul.f32 %v719, %v744
    %v770 = vmul.f32 %v720, %v748
    %v771 = vmul.f32 %v721, %v744
    %v772 = vmul.f32 %v722, %v748
    %v773 = vmul.f32 %v723, %v744
    %v774 = vmul.f32 %v724, %v748
    %v775 = vmul.f32 %v725, %v744
    %v776 = vmul.f32 %v726, %v748
    %v777 = vmul.f32 %v727, %v744
    %v778 = vmul.f32 %v728, %v748
    %v779 = vmul.f32 %v729, %v744
    %v780 = vmul.f32 %v730, %v748
    %v781 = vlaneseq
    %v782 = vshrl.u32 %v781, 7
    %v783 = vsub.s32 2, %v782
    %v784 = vrot.slane %v134, %v783
    %v785 = vlaneseq
    %v786 = vshrl.u32 %v785, 7
    %v787 = vsub.s32 6, %v786
    %v788 = vrot.slane %v134, %v787
    %v791 = vlaneseq
    %v792 = vshrl.u32 %v791, 7
    %v793 = vsub.s32 2, %v792
    %v794 = vrot.slane %v784, %v793
    %v795 = vlaneseq
    %v796 = vshrl.u32 %v795, 7
    %v797 = vsub.s32 2, %v796
    %v798 = vrot.slane %v788, %v797
    %v799 = vadd.f32 %v749, %v794
    %v800 = vadd.f32 %v750, %v798
    %v801 = vadd.f32 %v751, %v794
    %v802 = vadd.f32 %v752, %v798
    %v803 = vadd.f32 %v753, %v794
    %v804 = vadd.f32 %v754, %v798
    %v805 = vadd.f32 %v755, %v794
    %v806 = vadd.f32 %v756, %v798
    %v807 = vadd.f32 %v757, %v794
    %v808 = vadd.f32 %v758, %v798
    %v809 = vadd.f32 %v759, %v794
    %v810 = vadd.f32 %v760, %v798
    %v811 = vadd.f32 %v761, %v794
    %v812 = vadd.f32 %v762, %v798
    %v813 = vadd.f32 %v763, %v794
    %v814 = vadd.f32 %v764, %v798
    %v815 = vadd.f32 %v765, %v794
    %v816 = vadd.f32 %v766, %v798
    %v817 = vadd.f32 %v767, %v794
    %v818 = vadd.f32 %v768, %v798
    %v819 = vadd.f32 %v769, %v794
    %v820 = vadd.f32 %v770, %v798
    %v821 = vadd.f32 %v771, %v794
    %v822 = vadd.f32 %v772, %v798
    %v823 = vadd.f32 %v773, %v794
    %v824 = vadd.f32 %v774, %v798
    %v825 = vadd.f32 %v775, %v794
    %v826 = vadd.f32 %v776, %v798
    %v827 = vadd.f32 %v777, %v794
    %v828 = vadd.f32 %v778, %v798
    %v829 = vadd.f32 %v779, %v794
    %v830 = vadd.f32 %v780, %v798
    %831 = vst [vmem:[#allocation8] sm:$0xff] %v799
    %832 = vst [vmem:[#allocation8 + $0x8] sm:$0xff] %v800
    %833 = vst [vmem:[#allocation8 + $0x10] sm:$0xff] %v801
    %834 = vst [vmem:[#allocation8 + $0x18] sm:$0xff] %v802
    %835 = vst [vmem:[#allocation8 + $0x20] sm:$0xff] %v803
    %836 = vst [vmem:[#allocation8 + $0x28] sm:$0xff] %v804
    %837 = vst [vmem:[#allocation8 + $0x30] sm:$0xff] %v805
    %838 = vst [vmem:[#allocation8 + $0x38] sm:$0xff] %v806
    %839 = vst [vmem:[#allocation8 + $0x40] sm:$0xff] %v807
    %840 = vst [vmem:[#allocation8 + $0x48] sm:$0xff] %v808
    %841 = vst [vmem:[#allocation8 + $0x50] sm:$0xff] %v809
    %842 = vst [vmem:[#allocation8 + $0x58] sm:$0xff] %v810
    %843 = vst [vmem:[#allocation8 + $0x60] sm:$0xff] %v811
    %844 = vst [vmem:[#allocation8 + $0x68] sm:$0xff] %v812
    %845 = vst [vmem:[#allocation8 + $0x70] sm:$0xff] %v813
    %846 = vst [vmem:[#allocation8 + $0x78] sm:$0xff] %v814
    %847 = vst [vmem:[#allocation8 + $0x80] sm:$0xff] %v815
    %848 = vst [vmem:[#allocation8 + $0x88] sm:$0xff] %v816
    %849 = vst [vmem:[#allocation8 + $0x90] sm:$0xff] %v817
    %850 = vst [vmem:[#allocation8 + $0x98] sm:$0xff] %v818
    %851 = vst [vmem:[#allocation8 + $0xa0] sm:$0xff] %v819
    %852 = vst [vmem:[#allocation8 + $0xa8] sm:$0xff] %v820
    %853 = vst [vmem:[#allocation8 + $0xb0] sm:$0xff] %v821
    %854 = vst [vmem:[#allocation8 + $0xb8] sm:$0xff] %v822
    %855 = vst [vmem:[#allocation8 + $0xc0] sm:$0xff] %v823
    %856 = vst [vmem:[#allocation8 + $0xc8] sm:$0xff] %v824
    %857 = vst [vmem:[#allocation8 + $0xd0] sm:$0xff] %v825
    %858 = vst [vmem:[#allocation8 + $0xd8] sm:$0xff] %v826
    %859 = vst [vmem:[#allocation8 + $0xe0] sm:$0xff] %v827
    %860 = vst [vmem:[#allocation8 + $0xe8] sm:$0xff] %v828
    %861 = vst [vmem:[#allocation8 + $0xf0] sm:$0xff] %v829
    %862 = vst [vmem:[#allocation8 + $0xf8] sm:$0xff] %v830
    // Predicated region
    $region26: #{tpu_custom_call.1} parent=1 // pred_check
      _
    $region27: #{tpu_custom_call.1} parent=1 // pred_check_branch
      %864 = sbr.rel (0) target = $region29
    $region28: #{tpu_custom_call.1} parent=1 // pred_region
      %s866 = ssub.s32 4096, 4096
      %867 = vsyncadd [#allocation4], %s866
      %s868 = sshll.u32 [#allocation8], 4
      %s869 = int_to_ptr.vmem [resolvable:$true] %s868
      %874 = dma.vmem_to_hbm [thread:$0]  %s869, 4096, %s3, [#allocation4], 256, 256, 16
    $region29: #{tpu_custom_call.1} parent=1 // pred_fallthru
      _
    // Predicated region
    $region30: #{tpu_custom_call.1} parent=1 // pred_check
      _
    $region31: #{tpu_custom_call.1} parent=1 // pred_check_branch
      %876 = sbr.rel (0) target = $region33
    $region32: #{tpu_custom_call.1} parent=1 // pred_region
      %877 = dma.done [#allocation4], 4096
    $region33: #{tpu_custom_call.1} parent=1 // pred_fallthru
      _
    %878 = vsyncpa [#allocation3], 1
    %879 = vsyncpa [#allocation6], 1
    %880 = vsyncpa [#allocation4], 1

</llo_original>
